<compile_context>
chip_gen: v6e
topology: v6e:2x2x1
jax: 0.10.0
libtpu: 0.0.40
codegen_flags: <defaults>
</compile_context>

<pallas_src>
import jax
import jax.numpy as jnp
from jax.experimental import pallas as pl
from jax.experimental.pallas import tpu as pltpu


def temporal_attention_kernel(x_ref, w1_ref, b1_ref, w2_ref, o_ref):
    BT, H = x_ref.shape            # BT = Bb * T (flattened batch-block rows)
    Bb = o_ref.shape[0]
    T = BT // Bb
    Hh = w1_ref.shape[1]

    x = x_ref[...]                                                  # (Bb*T, H), compute dtype

    # Linear(H -> H//2) + tanh: one MXU matmul over all Bb*T rows, f32 accum.
    h = jnp.tanh(
        jnp.dot(x, w1_ref[...], preferred_element_type=jnp.float32)
        + b1_ref[...])                                              # (Bb*T, Hh) f32

    # Linear(H//2 -> 1) as a VPU multiply + lane reduce (a width-1 MXU matmul
    # wastes the unit). b2 is dropped: softmax over T is shift-invariant.
    s = jnp.sum(h * w2_ref[...], axis=-1, keepdims=True)            # (Bb*T, 1) f32

    # Softmax over the temporal axis, per batch row. Only the tiny score
    # tensor is reshaped; exact division for the denominator.
    s3 = s.reshape(Bb, T, 1)
    e = jnp.exp(s3 - jnp.max(s3, axis=1, keepdims=True))            # (Bb, T, 1)
    a = e / jnp.sum(e, axis=1, keepdims=True)                       # (Bb, T, 1)

    # Weighted temporal sum in f32 (v5e's VPU has no bf16; upcast is in-vreg).
    xw = x.astype(jnp.float32) * a.reshape(BT, 1)                   # (Bb*T, H) f32
    # TODO(synk): when T % 8 != 0 this reshape is a relayout copy; pad T (with
    # masked scores) in the wrapper if such shapes show up in real workloads.
    y = jnp.sum(xw.reshape(Bb, T, H), axis=1)                       # (Bb, H) f32
    o_ref[...] = y.astype(o_ref.dtype)


def _choose_batch_block(B, T, H, Hh, x_itemsize, w_itemsize,
                        target_rows=1024, vmem_budget=20 * 1024 * 1024):
    """Pick the per-step batch block Bb.

    Constraints / preferences (in order):
      * Bb divides B and the (Bb, H) output block is sublane-aligned
        (Bb % 8 == 0) unless Bb == B (full-array block).
      * Estimated total VMEM (double-buffered x tile, f32 temporaries, h,
        double-buffered output, resident weights) fits the budget — sized for
        v7x's 32 MiB default scoped VMEM with headroom; v5e/v6e have more.
      * At least 2 grid steps so v7x's two TensorCores both get work
        (preferring an even number of steps).
      * Bb*T >= target_rows to amortize the ~0.35 us per-grid-step overhead
        and keep the first-linear matmul and DMAs big.
    """
    def vmem_bytes(d):
        x_tile = d * T * H * x_itemsize          # pipelined input tile
        f32_tile = d * T * H * 4                 # in-kernel f32 upcast / weighted copy
        h_tile = 2 * d * T * Hh * 4              # h + pre-tanh / score temporaries
        out_tile = d * H * 4
        weights = H * Hh * w_itemsize + 4 * Hh * 4
        return 2 * x_tile + f32_tile + h_tile + 2 * out_tile + weights

    aligned = [d for d in range(1, B + 1)
               if B % d == 0 and (d % 8 == 0 or d == B)]
    feasible = [d for d in aligned if vmem_bytes(d) <= vmem_budget]
    if not feasible:
        return min(aligned)
    multi = [d for d in feasible if B // d >= 2]
    pool = multi if multi else feasible
    reach = [d for d in pool if d * T >= target_rows]
    if reach:
        even = [d for d in reach if (B // d) % 2 == 0]
        return min(even) if even else min(reach)
    return max(pool)


def _resident_spec(shape, single_buffer):
    """BlockSpec for a grid-invariant (weight/bias) operand.

    The index_map is constant, so the block is fetched once; single-buffering
    (pl.Buffered(1)) drops the useless second buffer and frees VMEM for a
    bigger x tile.
    """
    index_map = lambda b: (0,) * len(shape)
    if single_buffer:
        return pl.BlockSpec(shape, index_map, pipeline_mode=pl.Buffered(1))
    return pl.BlockSpec(shape, index_map)


def temporal_attention(x, w1, b1, w2, b2, *, block_b=None,
                       compute_dtype=jnp.bfloat16,
                       single_buffer_weights=True):
    """x: (B, T, H); w1: (H, Hh); b1: (Hh,)/(1, Hh); w2: (Hh, 1)/(Hh,).

    b2 is accepted for parity with the PyTorch module but dropped: softmax over
    the temporal axis is invariant to a constant shift of the scores.
    x and w1 are cast to `compute_dtype` (bf16 by default) for the HBM stream
    and the MXU matmul; accumulation, softmax and the weighted temporal sum
    stay in f32. Pass compute_dtype=jnp.float32 for exact f32 numerics.
    """
    del b2
    B, T, H = x.shape
    Hh = w1.shape[1]
    out_dtype = x.dtype

    b1 = b1.astype(jnp.float32).reshape(1, Hh)
    w2 = w2.astype(jnp.float32).reshape(1, Hh)   # row layout: VPU mul + lane reduce
    xc = x.astype(compute_dtype)
    w1c = w1.astype(compute_dtype)

    Bb = block_b if block_b is not None else _choose_batch_block(
        B, T, H, Hh,
        x_itemsize=xc.dtype.itemsize, w_itemsize=w1c.dtype.itemsize)
    assert B % Bb == 0, "batch block must divide batch"

    # Collapse (B, T, H) -> (B*T, H) in the wrapper: contiguous, so it is a
    # free bitcast here and the kernel never has to relayout the big tile.
    x2d = xc.reshape(B * T, H)

    cost = pl.CostEstimate(
        flops=2 * B * T * H * Hh + 2 * B * T * Hh + 2 * B * T * H,
        transcendentals=B * T * Hh + B * T,
        bytes_accessed=int(xc.dtype.itemsize * B * T * H
                           + x.dtype.itemsize * B * H
                           + w1c.dtype.itemsize * H * Hh
                           + 4 * 2 * Hh),
    )

    return pl.pallas_call(
        temporal_attention_kernel,
        out_shape=jax.ShapeDtypeStruct((B, H), out_dtype),
        grid_spec=pltpu.PrefetchScalarGridSpec(
            num_scalar_prefetch=0,
            grid=(B // Bb,),
            in_specs=[
                pl.BlockSpec((Bb * T, H), lambda b: (b, 0)),
                _resident_spec((H, Hh), single_buffer_weights),
                _resident_spec((1, Hh), single_buffer_weights),
                _resident_spec((1, Hh), single_buffer_weights),
            ],
            out_specs=pl.BlockSpec((Bb, H), lambda b: (b, 0)),
        ),
        compiler_params=pltpu.CompilerParams(
            dimension_semantics=("parallel",),
            vmem_limit_bytes=32 * 1024 * 1024,
        ),
        cost_estimate=cost,
    )(x2d, w1c, b1, w2)


def temporal_attention_ref(x, w1, b1, w2, b2):
    h = jnp.tanh(jnp.dot(x, w1, precision=jax.lax.Precision.HIGHEST)
                 + b1.reshape(1, -1))                               # (B, T, Hh)
    s = jnp.dot(h, w2.reshape(-1, 1),
                precision=jax.lax.Precision.HIGHEST) + b2.reshape(1, 1)
    a = jax.nn.softmax(s, axis=1)                                   # softmax over T
    return jnp.sum(x * a, axis=1)                                   # (B, H)


if __name__ == "__main__":
    B, T, H = 2, 8, 32
    Hh = H // 2

    key = jax.random.PRNGKey(0)
    kx, kw1, kb1, kw2, kb2 = jax.random.split(key, 5)

    x = jax.random.normal(kx, (B, T, H), dtype=jnp.float32)
    # nn.Linear parameters, stored transposed so the forward matmul is x @ W.
    w1 = jax.random.normal(kw1, (H, Hh), dtype=jnp.float32) * 0.1
    b1 = jax.random.normal(kb1, (1, Hh), dtype=jnp.float32) * 0.1
    w2 = jax.random.normal(kw2, (Hh, 1), dtype=jnp.float32) * 0.1
    b2 = jax.random.normal(kb2, (1, 1), dtype=jnp.float32) * 0.1

    def run(**kw):
        return jax.block_until_ready(temporal_attention(x, w1, b1, w2, b2, **kw))

    try:
        out_bf16 = run()              # default: bf16 x/W1, single-buffered weights
        single_buffer = True
    except Exception:
        # TODO(synk): jax without BlockSpec pipeline_mode / pl.Buffered(1) —
        # retry with the default double-buffered weight blocks.
        single_buffer = False
        out_bf16 = run(single_buffer_weights=False)

    out_f32 = run(compute_dtype=jnp.float32, single_buffer_weights=single_buffer)

    # f32 path vs. exact f32 reference (exact softmax division in-kernel).
    ref_f32 = temporal_attention_ref(x, w1, b1, w2, b2)
    assert out_f32.shape == (B, H)
    assert jnp.allclose(out_f32, ref_f32, atol=1e-3, rtol=1e-3), "f32 kernel mismatch"

    # bf16 path vs. a reference fed the same bf16-quantised x / W1 (the only
    # intended numerical difference of the fast path is that quantisation).
    xq = x.astype(jnp.bfloat16).astype(jnp.float32)
    w1q = w1.astype(jnp.bfloat16).astype(jnp.float32)
    ref_bf16 = temporal_attention_ref(xq, w1q, b1, w2, b2)
    assert out_bf16.shape == (B, H)
    assert jnp.allclose(out_bf16, ref_bf16, atol=2e-3, rtol=2e-3), "bf16 kernel mismatch"

    print("KERNEL_OK")
</pallas_src>

<mosaic_0001>
module attributes {stable_mosaic.version = 11 : i64} {
  func.func @temporal_attention_kernel(%arg0: i32, %arg1: memref<16x32xbf16, #tpu.memory_space<vmem>>, %arg2: memref<32x16xbf16, #tpu.memory_space<vmem>>, %arg3: memref<1x16xf32, #tpu.memory_space<vmem>>, %arg4: memref<1x16xf32, #tpu.memory_space<vmem>>, %arg5: memref<2x32xf32, #tpu.memory_space<vmem>>) attributes {dimension_semantics = [#tpu.dimension_semantics<parallel>], iteration_bounds = array<i64: 1>, scalar_prefetch = 0 : i64, scratch_operands = 0 : i64, tpu.core_type = #tpu.core_type<tc>, window_params = [{transform_indices = @transform_0, window_bounds = array<i64: 16, 32>}, {pipeline_mode = #tpu.pipeline_mode<synchronous>, transform_indices = @transform_1, window_bounds = array<i64: 32, 16>}, {pipeline_mode = #tpu.pipeline_mode<synchronous>, transform_indices = @transform_2, window_bounds = array<i64: 1, 16>}, {pipeline_mode = #tpu.pipeline_mode<synchronous>, transform_indices = @transform_3, window_bounds = array<i64: 1, 16>}, {transform_indices = @transform_4, window_bounds = array<i64: 2, 32>}]} {
    %c0 = arith.constant 0 : index
    %c0_0 = arith.constant 0 : index
    %0 = vector.load %arg1[%c0, %c0_0] : memref<16x32xbf16, #tpu.memory_space<vmem>>, vector<16x32xbf16>
    %c0_1 = arith.constant 0 : index
    %c0_2 = arith.constant 0 : index
    %1 = vector.load %arg2[%c0_1, %c0_2] : memref<32x16xbf16, #tpu.memory_space<vmem>>, vector<32x16xbf16>
    %cst = arith.constant dense<0.000000e+00> : vector<16x16xf32>
    %2 = tpu.matmul %0, %1, %cst {dimension_numbers = #tpu.dot_dimension_numbers<[1], [0], [0], [1], [0, 0, 1, 1], [], []>} : vector<16x32xbf16>, vector<32x16xbf16>, vector<16x16xf32> -> vector<16x16xf32>
    %c0_3 = arith.constant 0 : index
    %c0_4 = arith.constant 0 : index
    %3 = vector.load %arg3[%c0_3, %c0_4] : memref<1x16xf32, #tpu.memory_space<vmem>>, vector<1x16xf32>
    %4 = vector.broadcast %3 : vector<1x16xf32> to vector<16x16xf32>
    %5 = arith.addf %2, %4 : vector<16x16xf32>
    %6 = math.tanh %5 : vector<16x16xf32>
    %c0_5 = arith.constant 0 : index
    %c0_6 = arith.constant 0 : index
    %7 = vector.load %arg4[%c0_5, %c0_6] : memref<1x16xf32, #tpu.memory_space<vmem>>, vector<1x16xf32>
    %8 = vector.broadcast %7 : vector<1x16xf32> to vector<16x16xf32>
    %9 = arith.mulf %6, %8 : vector<16x16xf32>
    %cst_7 = arith.constant dense<0.000000e+00> : vector<16xf32>
    %10 = vector.multi_reduction <add>, %9, %cst_7 [1] : vector<16x16xf32> to vector<16xf32>
    %11 = vector.shape_cast %10 : vector<16xf32> to vector<16x1xf32>
    %12 = vector.shape_cast %11 : vector<16x1xf32> to vector<2x8x1xf32>
    %cst_8 = arith.constant dense<0xFF800000> : vector<2x1xf32>
    %13 = vector.multi_reduction <maximumf>, %12, %cst_8 [1] : vector<2x8x1xf32> to vector<2x1xf32>
    %14 = vector.shape_cast %13 : vector<2x1xf32> to vector<2x1x1xf32>
    %15 = vector.broadcast %14 : vector<2x1x1xf32> to vector<2x8x1xf32>
    %16 = arith.subf %12, %15 : vector<2x8x1xf32>
    %17 = math.exp %16 : vector<2x8x1xf32>
    %cst_9 = arith.constant dense<0.000000e+00> : vector<2x1xf32>
    %18 = vector.multi_reduction <add>, %17, %cst_9 [1] : vector<2x8x1xf32> to vector<2x1xf32>
    %19 = vector.shape_cast %18 : vector<2x1xf32> to vector<2x1x1xf32>
    %20 = vector.broadcast %19 : vector<2x1x1xf32> to vector<2x8x1xf32>
    %21 = arith.divf %17, %20 : vector<2x8x1xf32>
    %22 = arith.extf %0 : vector<16x32xbf16> to vector<16x32xf32>
    %23 = vector.shape_cast %21 : vector<2x8x1xf32> to vector<16x1xf32>
    %24 = vector.broadcast %23 : vector<16x1xf32> to vector<16x32xf32>
    %25 = arith.mulf %22, %24 : vector<16x32xf32>
    %26 = vector.shape_cast %25 : vector<16x32xf32> to vector<2x8x32xf32>
    %cst_10 = arith.constant dense<0.000000e+00> : vector<2x32xf32>
    %27 = vector.multi_reduction <add>, %26, %cst_10 [1] : vector<2x8x32xf32> to vector<2x32xf32>
    %c0_11 = arith.constant 0 : index
    %c0_12 = arith.constant 0 : index
    %28 = vector.load %arg5[%c0_11, %c0_12] : memref<2x32xf32, #tpu.memory_space<vmem>>, vector<2x32xf32>
    tpu.vector_store %arg5[%c0_11, %c0_12], %27 {strides = array<i32>} : memref<2x32xf32, #tpu.memory_space<vmem>>, vector<2x32xf32>,
    return
  }
  func.func @transform_0(%arg0: i32) -> (i32, i32) {
    %c0_i32 = arith.constant 0 : i32
    %c0_i32_0 = arith.constant 0 : i32
    return %arg0, %c0_i32 : i32, i32
  }
  func.func @transform_1(%arg0: i32) -> (i32, i32) {
    %c0_i32 = arith.constant 0 : i32
    %c0_i32_0 = arith.constant 0 : i32
    %c0_i32_1 = arith.constant 0 : i32
    return %c0_i32, %c0_i32_0 : i32, i32
  }
  func.func @transform_2(%arg0: i32) -> (i32, i32) {
    %c0_i32 = arith.constant 0 : i32
    %c0_i32_0 = arith.constant 0 : i32
    %c0_i32_1 = arith.constant 0 : i32
    return %c0_i32, %c0_i32_0 : i32, i32
  }
  func.func @transform_3(%arg0: i32) -> (i32, i32) {
    %c0_i32 = arith.constant 0 : i32
    %c0_i32_0 = arith.constant 0 : i32
    %c0_i32_1 = arith.constant 0 : i32
    return %c0_i32, %c0_i32_0 : i32, i32
  }
  func.func @transform_4(%arg0: i32) -> (i32, i32) {
    %c0_i32 = arith.constant 0 : i32
    %c0_i32_0 = arith.constant 0 : i32
    return %arg0, %c0_i32 : i32, i32
  }
}

module attributes {stable_mosaic.version = 11 : i64} {
  func.func @temporal_attention_kernel(%arg0: i32, %arg1: memref<16x32xbf16, #tpu.memory_space<vmem>>, %arg2: memref<32x16xbf16, #tpu.memory_space<vmem>>, %arg3: memref<1x16xf32, #tpu.memory_space<vmem>>, %arg4: memref<1x16xf32, #tpu.memory_space<vmem>>, %arg5: memref<2x32xf32, #tpu.memory_space<vmem>>) attributes {dimension_semantics = [#tpu.dimension_semantics<parallel>], iteration_bounds = array<i64: 1>, scalar_prefetch = 0 : i64, scratch_operands = 0 : i64, tpu.core_type = #tpu.core_type<tc>, window_params = [{transform_indices = @transform_0, window_bounds = array<i64: 16, 32>}, {pipeline_mode = #tpu.pipeline_mode<synchronous>, transform_indices = @transform_1, window_bounds = array<i64: 32, 16>}, {pipeline_mode = #tpu.pipeline_mode<synchronous>, transform_indices = @transform_2, window_bounds = array<i64: 1, 16>}, {pipeline_mode = #tpu.pipeline_mode<synchronous>, transform_indices = @transform_3, window_bounds = array<i64: 1, 16>}, {transform_indices = @transform_4, window_bounds = array<i64: 2, 32>}]} {
    %c0 = arith.constant 0 : index
    %c0_0 = arith.constant 0 : index
    %0 = vector.load %arg1[%c0, %c0_0] : memref<16x32xbf16, #tpu.memory_space<vmem>>, vector<16x32xbf16>
    %c0_1 = arith.constant 0 : index
    %c0_2 = arith.constant 0 : index
    %1 = vector.load %arg2[%c0_1, %c0_2] : memref<32x16xbf16, #tpu.memory_space<vmem>>, vector<32x16xbf16>
    %cst = arith.constant dense<0.000000e+00> : vector<16x16xf32>
    %2 = tpu.matmul %0, %1, %cst {dimension_numbers = #tpu.dot_dimension_numbers<[1], [0], [0], [1], [0, 0, 1, 1], [], []>} : vector<16x32xbf16>, vector<32x16xbf16>, vector<16x16xf32> -> vector<16x16xf32>
    %c0_3 = arith.constant 0 : index
    %c0_4 = arith.constant 0 : index
    %3 = vector.load %arg3[%c0_3, %c0_4] : memref<1x16xf32, #tpu.memory_space<vmem>>, vector<1x16xf32>
    %4 = vector.broadcast %3 : vector<1x16xf32> to vector<16x16xf32>
    %5 = arith.addf %2, %4 : vector<16x16xf32>
    %6 = math.tanh %5 : vector<16x16xf32>
    %c0_5 = arith.constant 0 : index
    %c0_6 = arith.constant 0 : index
    %7 = vector.load %arg4[%c0_5, %c0_6] : memref<1x16xf32, #tpu.memory_space<vmem>>, vector<1x16xf32>
    %8 = vector.broadcast %7 : vector<1x16xf32> to vector<16x16xf32>
    %9 = arith.mulf %6, %8 : vector<16x16xf32>
    %cst_7 = arith.constant dense<0.000000e+00> : vector<16xf32>
    %10 = vector.multi_reduction <add>, %9, %cst_7 [1] : vector<16x16xf32> to vector<16xf32>
    %11 = vector.shape_cast %10 : vector<16xf32> to vector<16x1xf32>
    %12 = vector.shape_cast %11 : vector<16x1xf32> to vector<2x8x1xf32>
    %cst_8 = arith.constant dense<0xFF800000> : vector<2x1xf32>
    %13 = vector.multi_reduction <maximumf>, %12, %cst_8 [1] : vector<2x8x1xf32> to vector<2x1xf32>
    %14 = vector.shape_cast %13 : vector<2x1xf32> to vector<2x1x1xf32>
    %15 = vector.broadcast %14 : vector<2x1x1xf32> to vector<2x8x1xf32>
    %16 = arith.subf %12, %15 : vector<2x8x1xf32>
    %17 = math.exp %16 : vector<2x8x1xf32>
    %cst_9 = arith.constant dense<0.000000e+00> : vector<2x1xf32>
    %18 = vector.multi_reduction <add>, %17, %cst_9 [1] : vector<2x8x1xf32> to vector<2x1xf32>
    %19 = vector.shape_cast %18 : vector<2x1xf32> to vector<2x1x1xf32>
    %20 = vector.broadcast %19 : vector<2x1x1xf32> to vector<2x8x1xf32>
    %21 = arith.divf %17, %20 : vector<2x8x1xf32>
    %22 = arith.extf %0 : vector<16x32xbf16> to vector<16x32xf32>
    %23 = vector.shape_cast %21 : vector<2x8x1xf32> to vector<16x1xf32>
    %24 = vector.broadcast %23 : vector<16x1xf32> to vector<16x32xf32>
    %25 = arith.mulf %22, %24 : vector<16x32xf32>
    %26 = vector.shape_cast %25 : vector<16x32xf32> to vector<2x8x32xf32>
    %cst_10 = arith.constant dense<0.000000e+00> : vector<2x32xf32>
    %27 = vector.multi_reduction <add>, %26, %cst_10 [1] : vector<2x8x32xf32> to vector<2x32xf32>
    %c0_11 = arith.constant 0 : index
    %c0_12 = arith.constant 0 : index
    %28 = vector.load %arg5[%c0_11, %c0_12] : memref<2x32xf32, #tpu.memory_space<vmem>>, vector<2x32xf32>
    tpu.vector_store %arg5[%c0_11, %c0_12], %27 {strides = array<i32>} : memref<2x32xf32, #tpu.memory_space<vmem>>, vector<2x32xf32>,
    return
  }
  func.func @transform_0(%arg0: i32) -> (i32, i32) {
    %c0_i32 = arith.constant 0 : i32
    %c0_i32_0 = arith.constant 0 : i32
    return %arg0, %c0_i32 : i32, i32
  }
  func.func @transform_1(%arg0: i32) -> (i32, i32) {
    %c0_i32 = arith.constant 0 : i32
    %c0_i32_0 = arith.constant 0 : i32
    %c0_i32_1 = arith.constant 0 : i32
    return %c0_i32, %c0_i32_0 : i32, i32
  }
  func.func @transform_2(%arg0: i32) -> (i32, i32) {
    %c0_i32 = arith.constant 0 : i32
    %c0_i32_0 = arith.constant 0 : i32
    %c0_i32_1 = arith.constant 0 : i32
    return %c0_i32, %c0_i32_0 : i32, i32
  }
  func.func @transform_3(%arg0: i32) -> (i32, i32) {
    %c0_i32 = arith.constant 0 : i32
    %c0_i32_0 = arith.constant 0 : i32
    %c0_i32_1 = arith.constant 0 : i32
    return %c0_i32, %c0_i32_0 : i32, i32
  }
  func.func @transform_4(%arg0: i32) -> (i32, i32) {
    %c0_i32 = arith.constant 0 : i32
    %c0_i32_0 = arith.constant 0 : i32
    return %arg0, %c0_i32 : i32, i32
  }
}

</mosaic_0001>

<llo_original>
// kernel: tpu_custom_call.1
$region0: #{tpu_custom_call.1}
  #allocation0 [shape = 'u32[]', space=smem, size = 0x4, offset = 0x4, fixed_abs, tag = 'smem constant byte address 0x4 - core index']
  #allocation1 [shape = 'u32[144,128]{1,0:T(1,128)}', space=vmem, size = 0x12000, scoped, tag = 'internal scratch']
  %s0 = inlined_call_operand.vmem [shape: bf16[16,32], index: 0, kind: input, shape index: {}]
  %s1 = inlined_call_operand.vmem [shape: bf16[32,16], index: 1, kind: input, shape index: {}]
  %s2 = inlined_call_operand.vmem [shape: f32[1,16], index: 2, kind: input, shape index: {}]
  %s3 = inlined_call_operand.vmem [shape: f32[1,16], index: 3, kind: input, shape index: {}]
  %s4 = inlined_call_operand.hbm [shape: f32[2,32], index: 4, kind: output, shape index: {}]
  %s5 = sld [smem:[#allocation0]]
  $region26: #{tpu_custom_call.1} parent=0
    _
  %s7 = ssub.s32 1, %s5
  %s8 = scalar_select 0, %s7, %s5
  $region1: #{tpu_custom_call.1} parent=0
    #allocation2 [shape = 'u8[1024]{0}', space=vmem, size = 0x400, scoped, tag = 'output window, operand 0, single buffered']
    #allocation3 [shape = 's32[1]{0}', space=sflag, size = 0x4, scoped, tag = 'scoped memory for tpu_custom_call.1']
    %9 = vsyncpa [#allocation3], 0
    // Predicated region
    $region2: #{tpu_custom_call.1} parent=1 // pred_check
      _
    $region3: #{tpu_custom_call.1} parent=1 // pred_check_branch
      %11 = sbr.rel (0) target = $region5
    $region4: #{tpu_custom_call.1} parent=1 // pred_region
      _
    $region5: #{tpu_custom_call.1} parent=1 // pred_fallthru
      _
    // Predicated region
    $region6: #{tpu_custom_call.1} parent=1 // pred_check
      _
    $region7: #{tpu_custom_call.1} parent=1 // pred_check_branch
      %13 = sbr.rel (0) target = $region9
    $region8: #{tpu_custom_call.1} parent=1 // pred_region
      _
    $region9: #{tpu_custom_call.1} parent=1 // pred_fallthru
      _
    // Predicated region
    $region10: #{tpu_custom_call.1} parent=1 // pred_check
      _
    $region11: #{tpu_custom_call.1} parent=1 // pred_check_branch
      %15 = sbr.rel (0) target = $region13
    $region12: #{tpu_custom_call.1} parent=1 // pred_region
      _
    $region13: #{tpu_custom_call.1} parent=1 // pred_fallthru
      _
    // Predicated region
    $region14: #{tpu_custom_call.1} parent=1 // pred_check
      _
    $region15: #{tpu_custom_call.1} parent=1 // pred_check_branch
      %17 = sbr.rel (0) target = $region17
    $region16: #{tpu_custom_call.1} parent=1 // pred_region
      _
    $region17: #{tpu_custom_call.1} parent=1 // pred_fallthru
      _
    %v19 = vld [vmem:[%s0] sm:$0xf]
    %v20 = vld [vmem:[%s0 + $0x4] sm:$0xf]
    %v21 = vld [vmem:[%s1] sm:$0xf]
    %v22 = vld [vmem:[%s1 + $0x4] sm:$0xf]
    %v23 = vld [vmem:[%s1 + $0x8] sm:$0xf]
    %v24 = vld [vmem:[%s1 + $0xc] sm:$0xf]
    %v25 = vld [vmem:[%s2] sm:$0x1]
    %v27 = vlaneseq
    %v28 = vshrl.u32 %v27, 7
    %v29 = vsub.s32 0, %v28
    %v30 = vrot.slane %v25, %v29
    %v34 = vunpack.c.l.b16 %v19
    %v35 = vunpack.c.l.b16 %v20
    %v36 = vpack.c.b16 %v35, %v34
    %v41 = vunpack.c.l.b16 %v21
    %v42 = vunpack.c.l.b16 %v22
    %v43 = vunpack.c.l.b16 %v23
    %v44 = vunpack.c.l.b16 %v24
    %v45 = vpack.c.b16 %v42, %v41
    %v46 = vpack.c.b16 %v44, %v43
    %vm49 = vcmask 261120
    %v51 = vsel %vm49, %v36, 0
    %53 = vmatprep.subr.bf16.mxu0 0
    %54 = vmatpush1.bf16.msra.mxu0 0
    %55 = vmatprep.subr.bf16.mxu0 0
    %56 = vmatpush1.bf16.msra.mxu0 0
    %57 = vmatprep.subr.bf16.mxu0 0
    %58 = vmatpush1.bf16.msra.mxu0 0
    %59 = vmatprep.subr.bf16.mxu0 0
    %60 = vmatpush1.bf16.msra.mxu0 0
    %61 = vmatprep.subr.bf16.mxu0 0
    %62 = vmatpush1.bf16.msra.mxu0 0
    %63 = vmatprep.subr.bf16.mxu0 0
    %64 = vmatpush1.bf16.msra.mxu0 0
    %65 = vmatprep.subr.bf16.mxu0 0
    %66 = vmatpush1.bf16.msra.mxu0 %v46
    %67 = vmatprep.subr.bf16.mxu0 0
    %68 = vmatpush1.bf16.msra.mxu0 %v45
    %69 = vmatprep.subr.bf16.mxu0 0
    %70 = vmatpush2.bf16.msra.mxu0 0
    %71 = vmatprep.subr.bf16.mxu0 0
    %72 = vmatpush2.bf16.msra.mxu0 0
    %73 = vmatprep.subr.bf16.mxu0 0
    %74 = vmatpush2.bf16.msra.mxu0 0
    %75 = vmatprep.subr.bf16.mxu0 0
    %76 = vmatpush2.bf16.msra.mxu0 0
    %77 = vmatprep.subr.bf16.mxu0 0
    %78 = vmatpush2.bf16.msra.mxu0 0
    %79 = vmatprep.subr.bf16.mxu0 0
    %80 = vmatpush2.bf16.msra.mxu0 0
    %81 = vmatprep.subr.bf16.mxu0 0
    %82 = vmatpush2.bf16.msra.mxu0 0
    %83 = vmatprep.subr.bf16.mxu0 0
    %84 = vmatpush2.bf16.msra.mxu0 0
    %85 = vmatprep.mubr.bf16.mxu0 0
    %86 = vmatmul.mubr.bf16.gmra.mxu0 %v51
    %v87 = vpop.f32.mrf.mxu0
    %v88 = vadd.f32 %v30, %v87
    %v89 = vpop.f32.mrf.mxu0
    %v90 = vpop.f32.mrf.mxu0
    %v91 = vadd.f32 %v30, %v90
    %v92 = vpop.f32.mrf.mxu0
    %93 = vdwg.mxu0
    %v94 = vtanh.pop %v88
    %v95 = vtanh.pop %v91
    %v96 = vld [vmem:[%s3] sm:$0x1]
    %v98 = vlaneseq
    %v99 = vshrl.u32 %v98, 7
    %v100 = vsub.s32 0, %v99
    %v101 = vrot.slane %v96, %v100
    %v103 = vmul.f32 %v94, %v101
    %v104 = vmul.f32 %v95, %v101
    %vm105 = vcmask 130048
    %v106 = vsel %vm105, %v103, 0.0
    %107 = vadd.xlane.f32.xlu0 %v106
    %v108 = vpop.xlane.xlu0 %107
    %v109 = vsel %vm105, %v104, 0.0
    %110 = vadd.xlane.f32.xlu0 %v109
    %v111 = vpop.xlane.xlu0 %110
    %v112 = vrot.slane %v108, 4
    %v113 = vmax.f32 %v108, %v112
    %v114 = vrot.slane %v113, 2
    %v115 = vmax.f32 %v113, %v114
    %v116 = vrot.slane %v115, 1
    %v117 = vmax.f32 %v115, %v116
    %v118 = vrot.slane %v111, 4
    %v119 = vmax.f32 %v111, %v118
    %v120 = vrot.slane %v119, 2
    %v121 = vmax.f32 %v119, %v120
    %v122 = vrot.slane %v121, 1
    %v123 = vmax.f32 %v121, %v122
    %v124 = vsub.f32 %v108, %v117
    %v125 = vsub.f32 %v111, %v123
    %v126 = vmul.f32 %v124, 1.442695
    %v127 = vpow.pop %v126
    %v128 = vmul.f32 %v125, 1.442695
    %v129 = vpow.pop %v128
    %v130 = vrot.slane %v127, 4
    %v131 = vadd.f32 %v127, %v130
    %v132 = vrot.slane %v131, 2
    %v133 = vadd.f32 %v131, %v132
    %v134 = vrot.slane %v133, 1
    %v135 = vadd.f32 %v133, %v134
    %v136 = vrot.slane %v129, 4
    %v137 = vadd.f32 %v129, %v136
    %v138 = vrot.slane %v137, 2
    %v139 = vadd.f32 %v137, %v138
    %v140 = vrot.slane %v139, 1
    %v141 = vadd.f32 %v139, %v140
    %v142 = vrcp.pop %v135
    %v143 = vmul.f32 %v127, %v142
    %v144 = vrcp.pop %v141
    %v145 = vmul.f32 %v129, %v144
    %v146 = vunpack.c.l.bf16 %v19
    %v147 = vunpack.c.l.bf16 %v20
    %v148 = vmul.f32 %v146, %v143
    %v149 = vmul.f32 %v147, %v145
    %v150 = vsel %vm49, %v148, 0.0
    %v151 = vrot.slane %v150, 4
    %v152 = vadd.f32 %v150, %v151
    %v153 = vrot.slane %v152, 2
    %v154 = vadd.f32 %v152, %v153
    %v155 = vrot.slane %v154, 1
    %v156 = vadd.f32 %v154, %v155
    %v157 = vsel %vm49, %v149, 0.0
    %v158 = vrot.slane %v157, 4
    %v159 = vadd.f32 %v157, %v158
    %v160 = vrot.slane %v159, 2
    %v161 = vadd.f32 %v159, %v160
    %v162 = vrot.slane %v161, 1
    %v163 = vadd.f32 %v161, %v162
    %vm166 = vcmask 1041409
    %v167 = vsel %vm166, %v163, %v156
    %vm169 = vcmask 254976
    %170 = vst.msk [vmem:[#allocation2] sm:$0x3] %vm169, %v167
    // Predicated region
    $region18: #{tpu_custom_call.1} parent=1 // pred_check
      _
    $region19: #{tpu_custom_call.1} parent=1 // pred_check_branch
      %172 = sbr.rel (0) target = $region21
    $region20: #{tpu_custom_call.1} parent=1 // pred_region
      %s174 = ssub.s32 32, 32
      %175 = vsyncadd [#allocation3], %s174
      %s177 = sshll.u32 [#allocation2], 4
      %s178 = int_to_ptr.vmem [resolvable:$true] %s177
      %180 = dma.vmem_to_hbm [thread:$0]  %s178, 32, %s4, [#allocation3]
    $region21: #{tpu_custom_call.1} parent=1 // pred_fallthru
      _
    // Predicated region
    $region22: #{tpu_custom_call.1} parent=1 // pred_check
      _
    $region23: #{tpu_custom_call.1} parent=1 // pred_check_branch
      %182 = sbr.rel (0) target = $region25
    $region24: #{tpu_custom_call.1} parent=1 // pred_region
      %183 = dma.done [#allocation3], 32
    $region25: #{tpu_custom_call.1} parent=1 // pred_fallthru
      _
    %184 = vsyncpa [#allocation3], 1

// kernel: tpu_custom_call.1
$region0: #{tpu_custom_call.1}
  #allocation0 [shape = 'u32[]', space=smem, size = 0x4, offset = 0x4, fixed_abs, tag = 'smem constant byte address 0x4 - core index']
  #allocation1 [shape = 'u32[144,128]{1,0:T(1,128)}', space=vmem, size = 0x12000, scoped, tag = 'internal scratch']
  %s0 = inlined_call_operand.vmem [shape: bf16[16,32], index: 0, kind: input, shape index: {}]
  %s1 = inlined_call_operand.vmem [shape: bf16[32,16], index: 1, kind: input, shape index: {}]
  %s2 = inlined_call_operand.vmem [shape: f32[1,16], index: 2, kind: input, shape index: {}]
  %s3 = inlined_call_operand.vmem [shape: f32[1,16], index: 3, kind: input, shape index: {}]
  %s4 = inlined_call_operand.hbm [shape: f32[2,32], index: 4, kind: output, shape index: {}]
  %s5 = sld [smem:[#allocation0]]
  $region26: #{tpu_custom_call.1} parent=0
    _
  %s7 = ssub.s32 1, %s5
  %s8 = scalar_select 0, %s7, %s5
  $region1: #{tpu_custom_call.1} parent=0
    #allocation2 [shape = 'u8[1024]{0}', space=vmem, size = 0x400, scoped, tag = 'output window, operand 0, single buffered']
    #allocation3 [shape = 's32[1]{0}', space=sflag, size = 0x4, scoped, tag = 'scoped memory for tpu_custom_call.1']
    %9 = vsyncpa [#allocation3], 0
    // Predicated region
    $region2: #{tpu_custom_call.1} parent=1 // pred_check
      _
    $region3: #{tpu_custom_call.1} parent=1 // pred_check_branch
      %11 = sbr.rel (0) target = $region5
    $region4: #{tpu_custom_call.1} parent=1 // pred_region
      _
    $region5: #{tpu_custom_call.1} parent=1 // pred_fallthru
      _
    // Predicated region
    $region6: #{tpu_custom_call.1} parent=1 // pred_check
      _
    $region7: #{tpu_custom_call.1} parent=1 // pred_check_branch
      %13 = sbr.rel (0) target = $region9
    $region8: #{tpu_custom_call.1} parent=1 // pred_region
      _
    $region9: #{tpu_custom_call.1} parent=1 // pred_fallthru
      _
    // Predicated region
    $region10: #{tpu_custom_call.1} parent=1 // pred_check
      _
    $region11: #{tpu_custom_call.1} parent=1 // pred_check_branch
      %15 = sbr.rel (0) target = $region13
    $region12: #{tpu_custom_call.1} parent=1 // pred_region
      _
    $region13: #{tpu_custom_call.1} parent=1 // pred_fallthru
      _
    // Predicated region
    $region14: #{tpu_custom_call.1} parent=1 // pred_check
      _
    $region15: #{tpu_custom_call.1} parent=1 // pred_check_branch
      %17 = sbr.rel (0) target = $region17
    $region16: #{tpu_custom_call.1} parent=1 // pred_region
      _
    $region17: #{tpu_custom_call.1} parent=1 // pred_fallthru
      _
    %v19 = vld [vmem:[%s0] sm:$0xf]
    %v20 = vld [vmem:[%s0 + $0x4] sm:$0xf]
    %v21 = vld [vmem:[%s1] sm:$0xf]
    %v22 = vld [vmem:[%s1 + $0x4] sm:$0xf]
    %v23 = vld [vmem:[%s1 + $0x8] sm:$0xf]
    %v24 = vld [vmem:[%s1 + $0xc] sm:$0xf]
    %v25 = vld [vmem:[%s2] sm:$0x1]
    %v27 = vlaneseq
    %v28 = vshrl.u32 %v27, 7
    %v29 = vsub.s32 0, %v28
    %v30 = vrot.slane %v25, %v29
    %v34 = vunpack.c.l.b16 %v19
    %v35 = vunpack.c.l.b16 %v20
    %v36 = vpack.c.b16 %v35, %v34
    %v41 = vunpack.c.l.b16 %v21
    %v42 = vunpack.c.l.b16 %v22
    %v43 = vunpack.c.l.b16 %v23
    %v44 = vunpack.c.l.b16 %v24
    %v45 = vpack.c.b16 %v42, %v41
    %v46 = vpack.c.b16 %v44, %v43
    %vm49 = vcmask 261120
    %v51 = vsel %vm49, %v36, 0
    %53 = vmatprep.subr.bf16.mxu0 0
    %54 = vmatpush1.bf16.msra.mxu0 0
    %55 = vmatprep.subr.bf16.mxu0 0
    %56 = vmatpush1.bf16.msra.mxu0 0
    %57 = vmatprep.subr.bf16.mxu0 0
    %58 = vmatpush1.bf16.msra.mxu0 0
    %59 = vmatprep.subr.bf16.mxu0 0
    %60 = vmatpush1.bf16.msra.mxu0 0
    %61 = vmatprep.subr.bf16.mxu0 0
    %62 = vmatpush1.bf16.msra.mxu0 0
    %63 = vmatprep.subr.bf16.mxu0 0
    %64 = vmatpush1.bf16.msra.mxu0 0
    %65 = vmatprep.subr.bf16.mxu0 0
    %66 = vmatpush1.bf16.msra.mxu0 %v46
    %67 = vmatprep.subr.bf16.mxu0 0
    %68 = vmatpush1.bf16.msra.mxu0 %v45
    %69 = vmatprep.subr.bf16.mxu0 0
    %70 = vmatpush2.bf16.msra.mxu0 0
    %71 = vmatprep.subr.bf16.mxu0 0
    %72 = vmatpush2.bf16.msra.mxu0 0
    %73 = vmatprep.subr.bf16.mxu0 0
    %74 = vmatpush2.bf16.msra.mxu0 0
    %75 = vmatprep.subr.bf16.mxu0 0
    %76 = vmatpush2.bf16.msra.mxu0 0
    %77 = vmatprep.subr.bf16.mxu0 0
    %78 = vmatpush2.bf16.msra.mxu0 0
    %79 = vmatprep.subr.bf16.mxu0 0
    %80 = vmatpush2.bf16.msra.mxu0 0
    %81 = vmatprep.subr.bf16.mxu0 0
    %82 = vmatpush2.bf16.msra.mxu0 0
    %83 = vmatprep.subr.bf16.mxu0 0
    %84 = vmatpush2.bf16.msra.mxu0 0
    %85 = vmatprep.mubr.bf16.mxu0 0
    %86 = vmatmul.mubr.bf16.gmra.mxu0 %v51
    %v87 = vpop.f32.mrf.mxu0
    %v88 = vadd.f32 %v30, %v87
    %v89 = vpop.f32.mrf.mxu0
    %v90 = vpop.f32.mrf.mxu0
    %v91 = vadd.f32 %v30, %v90
    %v92 = vpop.f32.mrf.mxu0
    %93 = vdwg.mxu0
    %v94 = vtanh.pop %v88
    %v95 = vtanh.pop %v91
    %v96 = vld [vmem:[%s3] sm:$0x1]
    %v98 = vlaneseq
    %v99 = vshrl.u32 %v98, 7
    %v100 = vsub.s32 0, %v99
    %v101 = vrot.slane %v96, %v100
    %v103 = vmul.f32 %v94, %v101
    %v104 = vmul.f32 %v95, %v101
    %vm105 = vcmask 130048
    %v106 = vsel %vm105, %v103, 0.0
    %107 = vadd.xlane.f32.xlu0 %v106
    %v108 = vpop.xlane.xlu0 %107
    %v109 = vsel %vm105, %v104, 0.0
    %110 = vadd.xlane.f32.xlu0 %v109
    %v111 = vpop.xlane.xlu0 %110
    %v112 = vrot.slane %v108, 4
    %v113 = vmax.f32 %v108, %v112
    %v114 = vrot.slane %v113, 2
    %v115 = vmax.f32 %v113, %v114
    %v116 = vrot.slane %v115, 1
    %v117 = vmax.f32 %v115, %v116
    %v118 = vrot.slane %v111, 4
    %v119 = vmax.f32 %v111, %v118
    %v120 = vrot.slane %v119, 2
    %v121 = vmax.f32 %v119, %v120
    %v122 = vrot.slane %v121, 1
    %v123 = vmax.f32 %v121, %v122
    %v124 = vsub.f32 %v108, %v117
    %v125 = vsub.f32 %v111, %v123
    %v126 = vmul.f32 %v124, 1.442695
    %v127 = vpow.pop %v126
    %v128 = vmul.f32 %v125, 1.442695
    %v129 = vpow.pop %v128
    %v130 = vrot.slane %v127, 4
    %v131 = vadd.f32 %v127, %v130
    %v132 = vrot.slane %v131, 2
    %v133 = vadd.f32 %v131, %v132
    %v134 = vrot.slane %v133, 1
    %v135 = vadd.f32 %v133, %v134
    %v136 = vrot.slane %v129, 4
    %v137 = vadd.f32 %v129, %v136
    %v138 = vrot.slane %v137, 2
    %v139 = vadd.f32 %v137, %v138
    %v140 = vrot.slane %v139, 1
    %v141 = vadd.f32 %v139, %v140
    %v142 = vrcp.pop %v135
    %v143 = vmul.f32 %v127, %v142
    %v144 = vrcp.pop %v141
    %v145 = vmul.f32 %v129, %v144
    %v146 = vunpack.c.l.bf16 %v19
    %v147 = vunpack.c.l.bf16 %v20
    %v148 = vmul.f32 %v146, %v143
    %v149 = vmul.f32 %v147, %v145
    %v150 = vsel %vm49, %v148, 0.0
    %v151 = vrot.slane %v150, 4
    %v152 = vadd.f32 %v150, %v151
    %v153 = vrot.slane %v152, 2
    %v154 = vadd.f32 %v152, %v153
    %v155 = vrot.slane %v154, 1
    %v156 = vadd.f32 %v154, %v155
    %v157 = vsel %vm49, %v149, 0.0
    %v158 = vrot.slane %v157, 4
    %v159 = vadd.f32 %v157, %v158
    %v160 = vrot.slane %v159, 2
    %v161 = vadd.f32 %v159, %v160
    %v162 = vrot.slane %v161, 1
    %v163 = vadd.f32 %v161, %v162
    %vm166 = vcmask 1041409
    %v167 = vsel %vm166, %v163, %v156
    %vm169 = vcmask 254976
    %170 = vst.msk [vmem:[#allocation2] sm:$0x3] %vm169, %v167
    // Predicated region
    $region18: #{tpu_custom_call.1} parent=1 // pred_check
      _
    $region19: #{tpu_custom_call.1} parent=1 // pred_check_branch
      %172 = sbr.rel (0) target = $region21
    $region20: #{tpu_custom_call.1} parent=1 // pred_region
      %s174 = ssub.s32 32, 32
      %175 = vsyncadd [#allocation3], %s174
      %s177 = sshll.u32 [#allocation2], 4
      %s178 = int_to_ptr.vmem [resolvable:$true] %s177
      %180 = dma.vmem_to_hbm [thread:$0]  %s178, 32, %s4, [#allocation3]
    $region21: #{tpu_custom_call.1} parent=1 // pred_fallthru
      _
    // Predicated region
    $region22: #{tpu_custom_call.1} parent=1 // pred_check
      _
    $region23: #{tpu_custom_call.1} parent=1 // pred_check_branch
      %182 = sbr.rel (0) target = $region25
    $region24: #{tpu_custom_call.1} parent=1 // pred_region
      %183 = dma.done [#allocation3], 32
    $region25: #{tpu_custom_call.1} parent=1 // pred_fallthru
      _
    %184 = vsyncpa [#allocation3], 1

</llo_original>
